<compile_context>
chip_gen: v6e
topology: v6e:2x2x1
jax: 0.10.0
libtpu: 0.0.40
codegen_flags: <defaults>
</compile_context>

<pallas_src>
import jax
import jax.numpy as jnp
from jax.experimental import pallas as pl
from jax.experimental.pallas import tpu as pltpu


def _integration_kernel(x_ref, w1_ref, b1_ref, w2_ref, b2_ref, w3_ref, b3_ref,
                        out_ref):
    """One batch tile, transposed layout: features on sublanes, batch on lanes."""
    x_t = x_ref[...]                                          # (20, TB) bf16

    # lin1 + ReLU:  h1_t = relu(W1 @ x_t + b1)
    h1 = jnp.dot(w1_ref[...], x_t, preferred_element_type=jnp.float32)
    h1 = jnp.maximum(h1 + b1_ref[...], 0.0)                   # (40, TB) f32

    # lin2 + ReLU:  h2_t = relu(W2 @ h1_t + b2)
    h2 = jnp.dot(w2_ref[...], h1.astype(jnp.bfloat16),
                 preferred_element_type=jnp.float32)
    h2 = jnp.maximum(h2 + b2_ref[...], 0.0)                   # (40, TB) f32

    # residual add (LRPResidual)
    res = h1 + h2

    # out projection:  logits_t = W3 @ res_t + b3
    logits = jnp.dot(w3_ref[...], res.astype(jnp.bfloat16),
                     preferred_element_type=jnp.float32)
    logits = logits + b3_ref[...]                             # (10, TB) f32

    # log(softmax(.)) along the feature axis (axis 0 = sublanes here)
    m = jnp.max(logits, axis=0, keepdims=True)
    shifted = logits - m
    lse = jnp.log(jnp.sum(jnp.exp(shifted), axis=0, keepdims=True))
    out_ref[...] = (shifted - lse).astype(out_ref.dtype)      # lane-dense store


def _round_up(x, m):
    return ((x + m - 1) // m) * m


# Hard ceiling: double-buffered x (bf16) + out (f32) tiles stay < 11 MiB, safe
# under v5e's 16 MiB scoped-VMEM default without any compiler-flag tuning.
_MAX_TILE_B = 65536
# Batch size above which we prefer >= 2 grid steps (v7x megacore sharding).
_MIN_BATCH_FOR_SPLIT = 8192


def _plan_batch_tiling(batch, requested_tile):
    """Pick (tile_b, num_tiles, b_pad): tile_b % 128 == 0, waste < 128/tile."""
    b128 = _round_up(batch, 128)
    tile_req = _round_up(min(max(int(requested_tile), 128), _MAX_TILE_B, b128), 128)
    num_tiles = pl.cdiv(b128, tile_req)
    # Give the second TensorCore work on v7x when the batch is large enough
    # to amortize per-step overhead on each half (harmless on v5e/v6e).
    if num_tiles == 1 and b128 >= _MIN_BATCH_FOR_SPLIT:
        num_tiles = 2
    # Balance tiles: padding waste is bounded by <128 rows per tile instead of
    # up to (tile_b - 128) rows for the last tile.
    tile_b = _round_up(pl.cdiv(b128, num_tiles), 128)
    num_tiles = pl.cdiv(b128, tile_b)
    return tile_b, num_tiles, num_tiles * tile_b


def integration_module_forward(x, params, *, tile_b=32768):
    """x: (B, 20) float32.  Returns (B, 10) float32 log-probabilities."""
    w1, b1, w2, b2, w3, b3 = params
    B, d_in = x.shape
    d_h1, d_h2, d_out = w1.shape[0], w2.shape[0], w3.shape[0]

    tile_b, num_tiles, b_pad = _plan_batch_tiling(B, tile_b)

    # Batch-on-lanes: transpose + zero-pad once at the wrapper boundary.
    x_t = jnp.pad(x.T, ((0, 0), (0, b_pad - B))).astype(jnp.bfloat16)

    w1b = w1.astype(jnp.bfloat16)                   # (40, 20)
    w2b = w2.astype(jnp.bfloat16)                   # (40, 40)
    w3b = w3.astype(jnp.bfloat16)                   # (10, 40)
    b1c = b1.reshape(d_h1, 1).astype(jnp.float32)   # (40, 1)
    b2c = b2.reshape(d_h2, 1).astype(jnp.float32)   # (40, 1)
    b3c = b3.reshape(d_out, 1).astype(jnp.float32)  # (10, 1)

    const = lambda i: (0, 0)   # weights/biases: same block every step -> resident

    flops = b_pad * 2 * (d_in * d_h1 + d_h1 * d_h2 + d_h2 * d_out)
    transcendentals = b_pad * (d_out + 1)           # exp per class + log
    bytes_accessed = (b_pad * (d_in * 2 + d_out * 4)
                      + 2 * (d_h1 * d_in + d_h2 * d_h1 + d_out * d_h2)
                      + 4 * (d_h1 + d_h2 + d_out))

    out_t = pl.pallas_call(
        _integration_kernel,
        out_shape=jax.ShapeDtypeStruct((d_out, b_pad), jnp.float32),
        grid=(num_tiles,),
        in_specs=[
            pl.BlockSpec((d_in, tile_b), lambda i: (0, i)),   # x tile, pipelined
            pl.BlockSpec((d_h1, d_in), const),
            pl.BlockSpec((d_h1, 1), const),
            pl.BlockSpec((d_h2, d_h1), const),
            pl.BlockSpec((d_h2, 1), const),
            pl.BlockSpec((d_out, d_h2), const),
            pl.BlockSpec((d_out, 1), const),
        ],
        out_specs=pl.BlockSpec((d_out, tile_b), lambda i: (0, i)),
        compiler_params=pltpu.CompilerParams(
            dimension_semantics=("parallel",)),
        cost_estimate=pl.CostEstimate(
            flops=int(flops),
            transcendentals=int(transcendentals),
            bytes_accessed=int(bytes_accessed)),
    )(x_t, w1b, b1c, w2b, b2c, w3b, b3c)

    return out_t[:, :B].T


def init_params(key):
    """PyTorch-style init: weights (out, in), biases (out,), uniform +/- 1/sqrt(fan_in)."""
    ks = jax.random.split(key, 6)

    def lin(kw, kb, fan_in, fan_out):
        bound = 1.0 / jnp.sqrt(jnp.float32(fan_in))
        w = jax.random.uniform(kw, (fan_out, fan_in), jnp.float32, -bound, bound)
        b = jax.random.uniform(kb, (fan_out,), jnp.float32, -bound, bound)
        return w, b

    w1, b1 = lin(ks[0], ks[1], 20, 40)
    w2, b2 = lin(ks[2], ks[3], 40, 40)
    w3, b3 = lin(ks[4], ks[5], 40, 10)
    return (w1, b1, w2, b2, w3, b3)


def _reference_forward(x, params):
    """Pure-JAX reference using the same bf16-input / f32-accum numerics as the kernel."""
    w1, b1, w2, b2, w3, b3 = params
    bf = lambda a: a.astype(jnp.bfloat16).astype(jnp.float32)
    h1 = jnp.maximum(bf(x) @ bf(w1).T + b1, 0.0)
    h2 = jnp.maximum(bf(h1) @ bf(w2).T + b2, 0.0)
    logits = bf(h1 + h2) @ bf(w3).T + b3
    return jax.nn.log_softmax(logits, axis=-1)


if __name__ == "__main__":
    key = jax.random.PRNGKey(0)
    k_x, k_p = jax.random.split(key)

    B = 8                                    # small test batch
    x = jax.random.normal(k_x, (B, 20), jnp.float32)
    params = init_params(k_p)

    out = integration_module_forward(x, params)
    out = jax.block_until_ready(out)

    ref = _reference_forward(x, params)
    assert out.shape == (B, 10)
    assert jnp.allclose(out, ref, atol=1e-4, rtol=1e-4), "mismatch vs reference"

    print("KERNEL_OK")
</pallas_src>

<mosaic_0001>
module attributes {stable_mosaic.version = 11 : i64} {
  func.func @_integration_kernel(%arg0: i32, %arg1: memref<20x128xbf16, #tpu.memory_space<vmem>>, %arg2: memref<40x20xbf16, #tpu.memory_space<vmem>>, %arg3: memref<40x1xf32, #tpu.memory_space<vmem>>, %arg4: memref<40x40xbf16, #tpu.memory_space<vmem>>, %arg5: memref<40x1xf32, #tpu.memory_space<vmem>>, %arg6: memref<10x40xbf16, #tpu.memory_space<vmem>>, %arg7: memref<10x1xf32, #tpu.memory_space<vmem>>, %arg8: memref<10x128xf32, #tpu.memory_space<vmem>>) attributes {dimension_semantics = [#tpu.dimension_semantics<parallel>], iteration_bounds = array<i64: 1>, scalar_prefetch = 0 : i64, scratch_operands = 0 : i64, tpu.core_type = #tpu.core_type<tc>, window_params = [{transform_indices = @transform_0, window_bounds = array<i64: 20, 128>}, {pipeline_mode = #tpu.pipeline_mode<synchronous>, transform_indices = @transform_1, window_bounds = array<i64: 40, 20>}, {pipeline_mode = #tpu.pipeline_mode<synchronous>, transform_indices = @transform_2, window_bounds = array<i64: 40, 1>}, {pipeline_mode = #tpu.pipeline_mode<synchronous>, transform_indices = @transform_3, window_bounds = array<i64: 40, 40>}, {pipeline_mode = #tpu.pipeline_mode<synchronous>, transform_indices = @transform_4, window_bounds = array<i64: 40, 1>}, {pipeline_mode = #tpu.pipeline_mode<synchronous>, transform_indices = @transform_5, window_bounds = array<i64: 10, 40>}, {pipeline_mode = #tpu.pipeline_mode<synchronous>, transform_indices = @transform_6, window_bounds = array<i64: 10, 1>}, {transform_indices = @transform_7, window_bounds = array<i64: 10, 128>}]} {
    %c0 = arith.constant 0 : index
    %c0_0 = arith.constant 0 : index
    %0 = vector.load %arg1[%c0, %c0_0] : memref<20x128xbf16, #tpu.memory_space<vmem>>, vector<20x128xbf16>
    %c0_1 = arith.constant 0 : index
    %c0_2 = arith.constant 0 : index
    %1 = vector.load %arg2[%c0_1, %c0_2] : memref<40x20xbf16, #tpu.memory_space<vmem>>, vector<40x20xbf16>
    %cst = arith.constant dense<0.000000e+00> : vector<40x128xf32>
    %2 = tpu.matmul %1, %0, %cst {dimension_numbers = #tpu.dot_dimension_numbers<[1], [0], [0], [1], [0, 0, 1, 1], [], []>} : vector<40x20xbf16>, vector<20x128xbf16>, vector<40x128xf32> -> vector<40x128xf32>
    %c0_3 = arith.constant 0 : index
    %c0_4 = arith.constant 0 : index
    %3 = vector.load %arg3[%c0_3, %c0_4] : memref<40x1xf32, #tpu.memory_space<vmem>>, vector<40x1xf32>
    %4 = vector.broadcast %3 : vector<40x1xf32> to vector<40x128xf32>
    %5 = arith.addf %2, %4 : vector<40x128xf32>
    %cst_5 = arith.constant 0.000000e+00 : f32
    %6 = vector.broadcast %cst_5 : f32 to vector<40x128xf32>
    %7 = arith.maximumf %5, %6 : vector<40x128xf32>
    %c0_6 = arith.constant 0 : index
    %c0_7 = arith.constant 0 : index
    %8 = vector.load %arg4[%c0_6, %c0_7] : memref<40x40xbf16, #tpu.memory_space<vmem>>, vector<40x40xbf16>
    %9 = arith.truncf %7 : vector<40x128xf32> to vector<40x128xbf16>
    %cst_8 = arith.constant dense<0.000000e+00> : vector<40x128xf32>
    %10 = tpu.matmul %8, %9, %cst_8 {dimension_numbers = #tpu.dot_dimension_numbers<[1], [0], [0], [1], [0, 0, 1, 1], [], []>} : vector<40x40xbf16>, vector<40x128xbf16>, vector<40x128xf32> -> vector<40x128xf32>
    %c0_9 = arith.constant 0 : index
    %c0_10 = arith.constant 0 : index
    %11 = vector.load %arg5[%c0_9, %c0_10] : memref<40x1xf32, #tpu.memory_space<vmem>>, vector<40x1xf32>
    %12 = vector.broadcast %11 : vector<40x1xf32> to vector<40x128xf32>
    %13 = arith.addf %10, %12 : vector<40x128xf32>
    %cst_11 = arith.constant 0.000000e+00 : f32
    %14 = vector.broadcast %cst_11 : f32 to vector<40x128xf32>
    %15 = arith.maximumf %13, %14 : vector<40x128xf32>
    %16 = arith.addf %7, %15 : vector<40x128xf32>
    %c0_12 = arith.constant 0 : index
    %c0_13 = arith.constant 0 : index
    %17 = vector.load %arg6[%c0_12, %c0_13] : memref<10x40xbf16, #tpu.memory_space<vmem>>, vector<10x40xbf16>
    %18 = arith.truncf %16 : vector<40x128xf32> to vector<40x128xbf16>
    %cst_14 = arith.constant dense<0.000000e+00> : vector<10x128xf32>
    %19 = tpu.matmul %17, %18, %cst_14 {dimension_numbers = #tpu.dot_dimension_numbers<[1], [0], [0], [1], [0, 0, 1, 1], [], []>} : vector<10x40xbf16>, vector<40x128xbf16>, vector<10x128xf32> -> vector<10x128xf32>
    %c0_15 = arith.constant 0 : index
    %c0_16 = arith.constant 0 : index
    %20 = vector.load %arg7[%c0_15, %c0_16] : memref<10x1xf32, #tpu.memory_space<vmem>>, vector<10x1xf32>
    %21 = vector.broadcast %20 : vector<10x1xf32> to vector<10x128xf32>
    %22 = arith.addf %19, %21 : vector<10x128xf32>
    %cst_17 = arith.constant dense<0xFF800000> : vector<128xf32>
    %23 = vector.multi_reduction <maximumf>, %22, %cst_17 [0] : vector<10x128xf32> to vector<128xf32>
    %24 = vector.shape_cast %23 : vector<128xf32> to vector<1x128xf32>
    %25 = vector.broadcast %24 : vector<1x128xf32> to vector<10x128xf32>
    %26 = arith.subf %22, %25 : vector<10x128xf32>
    %27 = math.exp %26 : vector<10x128xf32>
    %cst_18 = arith.constant dense<0.000000e+00> : vector<128xf32>
    %28 = vector.multi_reduction <add>, %27, %cst_18 [0] : vector<10x128xf32> to vector<128xf32>
    %29 = vector.shape_cast %28 : vector<128xf32> to vector<1x128xf32>
    %30 = math.log %29 : vector<1x128xf32>
    %31 = vector.broadcast %30 : vector<1x128xf32> to vector<10x128xf32>
    %32 = arith.subf %26, %31 : vector<10x128xf32>
    %c0_19 = arith.constant 0 : index
    %c0_20 = arith.constant 0 : index
    %33 = vector.load %arg8[%c0_19, %c0_20] : memref<10x128xf32, #tpu.memory_space<vmem>>, vector<10x128xf32>
    tpu.vector_store %arg8[%c0_19, %c0_20], %32 {strides = array<i32>} : memref<10x128xf32, #tpu.memory_space<vmem>>, vector<10x128xf32>,
    return
  }
  func.func @transform_0(%arg0: i32) -> (i32, i32) {
    %c0_i32 = arith.constant 0 : i32
    %c0_i32_0 = arith.constant 0 : i32
    return %c0_i32, %arg0 : i32, i32
  }
  func.func @transform_1(%arg0: i32) -> (i32, i32) {
    %c0_i32 = arith.constant 0 : i32
    %c0_i32_0 = arith.constant 0 : i32
    %c0_i32_1 = arith.constant 0 : i32
    return %c0_i32, %c0_i32_0 : i32, i32
  }
  func.func @transform_2(%arg0: i32) -> (i32, i32) {
    %c0_i32 = arith.constant 0 : i32
    %c0_i32_0 = arith.constant 0 : i32
    %c0_i32_1 = arith.constant 0 : i32
    return %c0_i32, %c0_i32_0 : i32, i32
  }
  func.func @transform_3(%arg0: i32) -> (i32, i32) {
    %c0_i32 = arith.constant 0 : i32
    %c0_i32_0 = arith.constant 0 : i32
    %c0_i32_1 = arith.constant 0 : i32
    return %c0_i32, %c0_i32_0 : i32, i32
  }
  func.func @transform_4(%arg0: i32) -> (i32, i32) {
    %c0_i32 = arith.constant 0 : i32
    %c0_i32_0 = arith.constant 0 : i32
    %c0_i32_1 = arith.constant 0 : i32
    return %c0_i32, %c0_i32_0 : i32, i32
  }
  func.func @transform_5(%arg0: i32) -> (i32, i32) {
    %c0_i32 = arith.constant 0 : i32
    %c0_i32_0 = arith.constant 0 : i32
    %c0_i32_1 = arith.constant 0 : i32
    return %c0_i32, %c0_i32_0 : i32, i32
  }
  func.func @transform_6(%arg0: i32) -> (i32, i32) {
    %c0_i32 = arith.constant 0 : i32
    %c0_i32_0 = arith.constant 0 : i32
    %c0_i32_1 = arith.constant 0 : i32
    return %c0_i32, %c0_i32_0 : i32, i32
  }
  func.func @transform_7(%arg0: i32) -> (i32, i32) {
    %c0_i32 = arith.constant 0 : i32
    %c0_i32_0 = arith.constant 0 : i32
    return %c0_i32, %arg0 : i32, i32
  }
}

</mosaic_0001>

<llo_original>
// kernel: tpu_custom_call.1
$region0: #{tpu_custom_call.1}
  #allocation0 [shape = 'u32[]', space=smem, size = 0x4, offset = 0x4, fixed_abs, tag = 'smem constant byte address 0x4 - core index']
  #allocation1 [shape = 'u32[144,128]{1,0:T(1,128)}', space=vmem, size = 0x12000, scoped, tag = 'internal scratch']
  %s0 = inlined_call_operand.vmem [shape: bf16[20,128], index: 0, kind: input, shape index: {}]
  %s1 = inlined_call_operand.vmem [shape: bf16[40,20], index: 1, kind: input, shape index: {}]
  %s2 = inlined_call_operand.vmem [shape: f32[40,1], index: 2, kind: input, shape index: {}]
  %s3 = inlined_call_operand.vmem [shape: bf16[40,40], index: 3, kind: input, shape index: {}]
  %s4 = inlined_call_operand.vmem [shape: f32[40,1], index: 4, kind: input, shape index: {}]
  %s5 = inlined_call_operand.vmem [shape: bf16[10,40], index: 5, kind: input, shape index: {}]
  %s6 = inlined_call_operand.vmem [shape: f32[10,1], index: 6, kind: input, shape index: {}]
  %s7 = inlined_call_operand.hbm [shape: f32[10,128], index: 7, kind: output, shape index: {}]
  %s8 = sld [smem:[#allocation0]]
  $region38: #{tpu_custom_call.1} parent=0
    _
  %s10 = ssub.s32 1, %s8
  %s11 = scalar_select 0, %s10, %s8
  $region1: #{tpu_custom_call.1} parent=0
    #allocation2 [shape = 'u8[8192]{0}', space=vmem, size = 0x2000, scoped, tag = 'output window, operand 0, single buffered']
    #allocation3 [shape = 's32[1]{0}', space=sflag, size = 0x4, scoped, tag = 'scoped memory for tpu_custom_call.1']
    %12 = vsyncpa [#allocation3], 0
    // Predicated region
    $region2: #{tpu_custom_call.1} parent=1 // pred_check
      _
    $region3: #{tpu_custom_call.1} parent=1 // pred_check_branch
      %14 = sbr.rel (0) target = $region5
    $region4: #{tpu_custom_call.1} parent=1 // pred_region
      _
    $region5: #{tpu_custom_call.1} parent=1 // pred_fallthru
      _
    // Predicated region
    $region6: #{tpu_custom_call.1} parent=1 // pred_check
      _
    $region7: #{tpu_custom_call.1} parent=1 // pred_check_branch
      %16 = sbr.rel (0) target = $region9
    $region8: #{tpu_custom_call.1} parent=1 // pred_region
      _
    $region9: #{tpu_custom_call.1} parent=1 // pred_fallthru
      _
    // Predicated region
    $region10: #{tpu_custom_call.1} parent=1 // pred_check
      _
    $region11: #{tpu_custom_call.1} parent=1 // pred_check_branch
      %18 = sbr.rel (0) target = $region13
    $region12: #{tpu_custom_call.1} parent=1 // pred_region
      _
    $region13: #{tpu_custom_call.1} parent=1 // pred_fallthru
      _
    // Predicated region
    $region14: #{tpu_custom_call.1} parent=1 // pred_check
      _
    $region15: #{tpu_custom_call.1} parent=1 // pred_check_branch
      %20 = sbr.rel (0) target = $region17
    $region16: #{tpu_custom_call.1} parent=1 // pred_region
      _
    $region17: #{tpu_custom_call.1} parent=1 // pred_fallthru
      _
    // Predicated region
    $region18: #{tpu_custom_call.1} parent=1 // pred_check
      _
    $region19: #{tpu_custom_call.1} parent=1 // pred_check_branch
      %22 = sbr.rel (0) target = $region21
    $region20: #{tpu_custom_call.1} parent=1 // pred_region
      _
    $region21: #{tpu_custom_call.1} parent=1 // pred_fallthru
      _
    // Predicated region
    $region22: #{tpu_custom_call.1} parent=1 // pred_check
      _
    $region23: #{tpu_custom_call.1} parent=1 // pred_check_branch
      %24 = sbr.rel (0) target = $region25
    $region24: #{tpu_custom_call.1} parent=1 // pred_region
      _
    $region25: #{tpu_custom_call.1} parent=1 // pred_fallthru
      _
    // Predicated region
    $region26: #{tpu_custom_call.1} parent=1 // pred_check
      _
    $region27: #{tpu_custom_call.1} parent=1 // pred_check_branch
      %26 = sbr.rel (0) target = $region29
    $region28: #{tpu_custom_call.1} parent=1 // pred_region
      _
    $region29: #{tpu_custom_call.1} parent=1 // pred_fallthru
      _
    %v28 = vld [vmem:[%s0] sm:$0xf]
    %v29 = vld [vmem:[%s0 + $0x4] sm:$0xf]
    %v30 = vld [vmem:[%s0 + $0x8] sm:$0x3]
    %v31 = vld [vmem:[%s1] sm:$0xf]
    %v32 = vld [vmem:[%s1 + $0x4] sm:$0xf]
    %v33 = vld [vmem:[%s1 + $0x8] sm:$0xf]
    %v34 = vld [vmem:[%s1 + $0xc] sm:$0xf]
    %v35 = vld [vmem:[%s1 + $0x10] sm:$0xf]
    %v36 = vld [vmem:[%s2] sm:$0xff]
    %v37 = vld [vmem:[%s2 + $0x8] sm:$0xff]
    %v38 = vld [vmem:[%s2 + $0x10] sm:$0xff]
    %v39 = vld [vmem:[%s2 + $0x18] sm:$0xff]
    %v40 = vld [vmem:[%s2 + $0x20] sm:$0xff]
    %42 = vset.pattern.permute.xlu0 0
    %43 = vperm.xlu0 %42, %v36
    %v44 = vpop.permute.xlu0 %43
    %47 = vset.pattern.permute.xlu0 0
    %48 = vperm.xlu0 %47, %v37
    %v49 = vpop.permute.xlu0 %48
    %52 = vset.pattern.permute.xlu0 0
    %53 = vperm.xlu0 %52, %v38
    %v54 = vpop.permute.xlu0 %53
    %57 = vset.pattern.permute.xlu0 0
    %58 = vperm.xlu0 %57, %v39
    %v59 = vpop.permute.xlu0 %58
    %62 = vset.pattern.permute.xlu0 0
    %63 = vperm.xlu0 %62, %v40
    %v64 = vpop.permute.xlu0 %63
    %v71 = vunpack.c.l.b16 %v31
    %v72 = vunpack.c.l.b16 %v32
    %v73 = vunpack.c.l.b16 %v33
    %v74 = vunpack.c.l.b16 %v34
    %v75 = vunpack.c.l.b16 %v35
    %v76 = vpack.c.b16 %v72, %v71
    %v77 = vpack.c.b16 %v74, %v73
    %v78 = vpack.c.b16 %v75, %v75
    %v82 = vunpack.c.l.b16 %v28
    %v83 = vunpack.c.l.b16 %v29
    %v84 = vunpack.c.l.b16 %v30
    %v85 = vpack.c.b16 %v83, %v82
    %v86 = vpack.c.b16 %v84, %v84
    %vm88 = vcmask 162816
    %v90 = vsel %vm88, %v76, 0
    %v93 = vsel %vm88, %v77, 0
    %v96 = vsel %vm88, %v78, 0
    %vm98 = vcmask 1041408
    %v100 = vsel %vm98, %v86, 0
    %102 = vmatprep.subr.bf16.mxu0 0
    %103 = vmatpush1.bf16.msra.mxu0 0
    %104 = vmatprep.subr.bf16.mxu0 0
    %105 = vmatpush1.bf16.msra.mxu0 0
    %106 = vmatprep.subr.bf16.mxu0 0
    %107 = vmatpush1.bf16.msra.mxu0 0
    %108 = vmatprep.subr.bf16.mxu0 0
    %109 = vmatpush1.bf16.msra.mxu0 0
    %110 = vmatprep.subr.bf16.mxu0 0
    %111 = vmatpush1.bf16.msra.mxu0 0
    %112 = vmatprep.subr.bf16.mxu0 0
    %113 = vmatpush1.bf16.msra.mxu0 0
    %114 = vmatprep.subr.bf16.mxu0 0
    %115 = vmatpush1.bf16.msra.mxu0 %v100
    %116 = vmatprep.subr.bf16.mxu0 0
    %117 = vmatpush1.bf16.msra.mxu0 %v85
    %118 = vmatprep.subr.bf16.mxu0 0
    %119 = vmatpush2.bf16.msra.mxu0 0
    %120 = vmatprep.subr.bf16.mxu0 0
    %121 = vmatpush2.bf16.msra.mxu0 0
    %122 = vmatprep.subr.bf16.mxu0 0
    %123 = vmatpush2.bf16.msra.mxu0 0
    %124 = vmatprep.subr.bf16.mxu0 0
    %125 = vmatpush2.bf16.msra.mxu0 0
    %126 = vmatprep.subr.bf16.mxu0 0
    %127 = vmatpush2.bf16.msra.mxu0 0
    %128 = vmatprep.subr.bf16.mxu0 0
    %129 = vmatpush2.bf16.msra.mxu0 0
    %130 = vmatprep.subr.bf16.mxu0 0
    %131 = vmatpush2.bf16.msra.mxu0 0
    %132 = vmatprep.subr.bf16.mxu0 0
    %133 = vmatpush2.bf16.msra.mxu0 0
    %134 = vmatprep.mubr.bf16.mxu0 0
    %135 = vmatmul.mubr.bf16.gmra.mxu0 %v90
    %v136 = vpop.f32.mrf.mxu0
    %v137 = vadd.f32 %v44, %v136
    %v138 = vpop.f32.mrf.mxu0
    %v139 = vpop.f32.mrf.mxu0
    %v140 = vadd.f32 %v49, %v139
    %v141 = vpop.f32.mrf.mxu0
    %142 = vmatprep.mubr.bf16.mxu0 0
    %143 = vmatmul.mubr.bf16.gmra.mxu0 %v93
    %v144 = vpop.f32.mrf.mxu0
    %v145 = vadd.f32 %v54, %v144
    %v146 = vpop.f32.mrf.mxu0
    %v147 = vpop.f32.mrf.mxu0
    %v148 = vadd.f32 %v59, %v147
    %v149 = vpop.f32.mrf.mxu0
    %150 = vmatprep.mubr.bf16.mxu0 0
    %151 = vmatmul.mubr.bf16.gmra.mxu0 %v96
    %v152 = vpop.f32.mrf.mxu0
    %v153 = vadd.f32 %v64, %v152
    %v154 = vpop.f32.mrf.mxu0
    %v155 = vpop.f32.mrf.mxu0
    %v156 = vpop.f32.mrf.mxu0
    %157 = vdwg.mxu0
    %v158 = vmax.f32 %v137, 0.0
    %v159 = vmax.f32 %v140, 0.0
    %v160 = vmax.f32 %v145, 0.0
    %v161 = vmax.f32 %v148, 0.0
    %v162 = vmax.f32 %v153, 0.0
    %v163 = vld [vmem:[%s3] sm:$0xf]
    %v164 = vld [vmem:[%s3 + $0x4] sm:$0xf]
    %v165 = vld [vmem:[%s3 + $0x8] sm:$0xf]
    %v166 = vld [vmem:[%s3 + $0xc] sm:$0xf]
    %v167 = vld [vmem:[%s3 + $0x10] sm:$0xf]
    %v168 = vpack.c.bf16 %v159, %v158
    %v169 = vpack.c.bf16 %v161, %v160
    %v170 = vpack.c.bf16 %v162, %v162
    %v171 = vld [vmem:[%s4] sm:$0xff]
    %v172 = vld [vmem:[%s4 + $0x8] sm:$0xff]
    %v173 = vld [vmem:[%s4 + $0x10] sm:$0xff]
    %v174 = vld [vmem:[%s4 + $0x18] sm:$0xff]
    %v175 = vld [vmem:[%s4 + $0x20] sm:$0xff]
    %177 = vset.pattern.permute.xlu0 0
    %178 = vperm.xlu0 %177, %v171
    %v179 = vpop.permute.xlu0 %178
    %182 = vset.pattern.permute.xlu0 0
    %183 = vperm.xlu0 %182, %v172
    %v184 = vpop.permute.xlu0 %183
    %187 = vset.pattern.permute.xlu0 0
    %188 = vperm.xlu0 %187, %v173
    %v189 = vpop.permute.xlu0 %188
    %192 = vset.pattern.permute.xlu0 0
    %193 = vperm.xlu0 %192, %v174
    %v194 = vpop.permute.xlu0 %193
    %197 = vset.pattern.permute.xlu0 0
    %198 = vperm.xlu0 %197, %v175
    %v199 = vpop.permute.xlu0 %198
    %v206 = vunpack.c.l.b16 %v163
    %v207 = vunpack.c.l.b16 %v164
    %v208 = vunpack.c.l.b16 %v165
    %v209 = vunpack.c.l.b16 %v166
    %v210 = vunpack.c.l.b16 %v167
    %v211 = vpack.c.b16 %v207, %v206
    %v212 = vpack.c.b16 %v209, %v208
    %v213 = vpack.c.b16 %v210, %v210
    %vm214 = vcmask 326656
    %v216 = vsel %vm214, %v211, 0
    %v219 = vsel %vm214, %v212, 0
    %v222 = vsel %vm214, %v213, 0
    %vm224 = vcmask 1043456
    %v226 = vsel %vm224, %v170, 0
    %228 = vmatprep.subr.bf16.mxu0 0
    %229 = vmatpush1.bf16.msra.mxu0 0
    %230 = vmatprep.subr.bf16.mxu0 0
    %231 = vmatpush1.bf16.msra.mxu0 0
    %232 = vmatprep.subr.bf16.mxu0 0
    %233 = vmatpush1.bf16.msra.mxu0 0
    %234 = vmatprep.subr.bf16.mxu0 0
    %235 = vmatpush1.bf16.msra.mxu0 0
    %236 = vmatprep.subr.bf16.mxu0 0
    %237 = vmatpush1.bf16.msra.mxu0 0
    %238 = vmatprep.subr.bf16.mxu0 0
    %239 = vmatpush1.bf16.msra.mxu0 %v226
    %240 = vmatprep.subr.bf16.mxu0 0
    %241 = vmatpush1.bf16.msra.mxu0 %v169
    %242 = vmatprep.subr.bf16.mxu0 0
    %243 = vmatpush1.bf16.msra.mxu0 %v168
    %244 = vmatprep.subr.bf16.mxu0 0
    %245 = vmatpush2.bf16.msra.mxu0 0
    %246 = vmatprep.subr.bf16.mxu0 0
    %247 = vmatpush2.bf16.msra.mxu0 0
    %248 = vmatprep.subr.bf16.mxu0 0
    %249 = vmatpush2.bf16.msra.mxu0 0
    %250 = vmatprep.subr.bf16.mxu0 0
    %251 = vmatpush2.bf16.msra.mxu0 0
    %252 = vmatprep.subr.bf16.mxu0 0
    %253 = vmatpush2.bf16.msra.mxu0 0
    %254 = vmatprep.subr.bf16.mxu0 0
    %255 = vmatpush2.bf16.msra.mxu0 0
    %256 = vmatprep.subr.bf16.mxu0 0
    %257 = vmatpush2.bf16.msra.mxu0 0
    %258 = vmatprep.subr.bf16.mxu0 0
    %259 = vmatpush2.bf16.msra.mxu0 0
    %260 = vmatprep.mubr.bf16.mxu0 0
    %261 = vmatmul.mubr.bf16.gmra.mxu0 %v216
    %v262 = vpop.f32.mrf.mxu0
    %v263 = vadd.f32 %v179, %v262
    %v264 = vpop.f32.mrf.mxu0
    %v265 = vpop.f32.mrf.mxu0
    %v266 = vadd.f32 %v184, %v265
    %v267 = vpop.f32.mrf.mxu0
    %268 = vmatprep.mubr.bf16.mxu0 0
    %269 = vmatmul.mubr.bf16.gmra.mxu0 %v219
    %v270 = vpop.f32.mrf.mxu0
    %v271 = vadd.f32 %v189, %v270
    %v272 = vpop.f32.mrf.mxu0
    %v273 = vpop.f32.mrf.mxu0
    %v274 = vadd.f32 %v194, %v273
    %v275 = vpop.f32.mrf.mxu0
    %276 = vmatprep.mubr.bf16.mxu0 0
    %277 = vmatmul.mubr.bf16.gmra.mxu0 %v222
    %v278 = vpop.f32.mrf.mxu0
    %v279 = vadd.f32 %v199, %v278
    %v280 = vpop.f32.mrf.mxu0
    %v281 = vpop.f32.mrf.mxu0
    %v282 = vpop.f32.mrf.mxu0
    %283 = vdwg.mxu0
    %v284 = vmax.f32 %v263, 0.0
    %v285 = vmax.f32 %v266, 0.0
    %v286 = vmax.f32 %v271, 0.0
    %v287 = vmax.f32 %v274, 0.0
    %v288 = vmax.f32 %v279, 0.0
    %v289 = vadd.f32 %v158, %v284
    %v290 = vadd.f32 %v159, %v285
    %v291 = vadd.f32 %v160, %v286
    %v292 = vadd.f32 %v161, %v287
    %v293 = vadd.f32 %v162, %v288
    %v294 = vld [vmem:[%s5] sm:$0xf]
    %v295 = vld [vmem:[%s5 + $0x4] sm:$0x1]
    %v296 = vpack.c.bf16 %v290, %v289
    %v297 = vpack.c.bf16 %v292, %v291
    %v298 = vpack.c.bf16 %v293, %v293
    %v299 = vld [vmem:[%s6] sm:$0xff]
    %v300 = vld [vmem:[%s6 + $0x8] sm:$0x3]
    %302 = vset.pattern.permute.xlu0 0
    %303 = vperm.xlu0 %302, %v299
    %v304 = vpop.permute.xlu0 %303
    %307 = vset.pattern.permute.xlu0 0
    %308 = vperm.xlu0 %307, %v300
    %v309 = vpop.permute.xlu0 %308
    %v313 = vunpack.c.l.b16 %v294
    %v314 = vunpack.c.l.b16 %v295
    %v315 = vpack.c.b16 %v314, %v313
    %v317 = vsel %vm214, %v315, 0
    %v320 = vsel %vm224, %v298, 0
    %322 = vmatprep.subr.bf16.mxu0 0
    %323 = vmatpush1.bf16.msra.mxu0 0
    %324 = vmatprep.subr.bf16.mxu0 0
    %325 = vmatpush1.bf16.msra.mxu0 0
    %326 = vmatprep.subr.bf16.mxu0 0
    %327 = vmatpush1.bf16.msra.mxu0 0
    %328 = vmatprep.subr.bf16.mxu0 0
    %329 = vmatpush1.bf16.msra.mxu0 0
    %330 = vmatprep.subr.bf16.mxu0 0
    %331 = vmatpush1.bf16.msra.mxu0 0
    %332 = vmatprep.subr.bf16.mxu0 0
    %333 = vmatpush1.bf16.msra.mxu0 %v320
    %334 = vmatprep.subr.bf16.mxu0 0
    %335 = vmatpush1.bf16.msra.mxu0 %v297
    %336 = vmatprep.subr.bf16.mxu0 0
    %337 = vmatpush1.bf16.msra.mxu0 %v296
    %338 = vmatprep.subr.bf16.mxu0 0
    %339 = vmatpush2.bf16.msra.mxu0 0
    %340 = vmatprep.subr.bf16.mxu0 0
    %341 = vmatpush2.bf16.msra.mxu0 0
    %342 = vmatprep.subr.bf16.mxu0 0
    %343 = vmatpush2.bf16.msra.mxu0 0
    %344 = vmatprep.subr.bf16.mxu0 0
    %345 = vmatpush2.bf16.msra.mxu0 0
    %346 = vmatprep.subr.bf16.mxu0 0
    %347 = vmatpush2.bf16.msra.mxu0 0
    %348 = vmatprep.subr.bf16.mxu0 0
    %349 = vmatpush2.bf16.msra.mxu0 0
    %350 = vmatprep.subr.bf16.mxu0 0
    %351 = vmatpush2.bf16.msra.mxu0 0
    %352 = vmatprep.subr.bf16.mxu0 0
    %353 = vmatpush2.bf16.msra.mxu0 0
    %354 = vmatprep.mubr.bf16.mxu0 0
    %355 = vmatmul.mubr.bf16.gmra.mxu0 %v317
    %v356 = vpop.f32.mrf.mxu0
    %v357 = vadd.f32 %v304, %v356
    %v358 = vpop.f32.mrf.mxu0
    %v359 = vpop.f32.mrf.mxu0
    %v360 = vadd.f32 %v309, %v359
    %v361 = vpop.f32.mrf.mxu0
    %362 = vdwg.mxu0
    %v363 = vsel %vm98, %v360, -inf
    %v364 = vmax.f32 %v357, %v363
    %v365 = vrot.slane %v364, 4
    %v366 = vmax.f32 %v364, %v365
    %v367 = vrot.slane %v366, 2
    %v368 = vmax.f32 %v366, %v367
    %v369 = vrot.slane %v368, 1
    %v370 = vmax.f32 %v368, %v369
    %v371 = vsub.f32 %v357, %v370
    %v372 = vsub.f32 %v360, %v370
    %v373 = vmul.f32 %v371, 1.442695
    %v374 = vpow.pop %v373
    %v375 = vmul.f32 %v372, 1.442695
    %v376 = vpow.pop %v375
    %v377 = vsel %vm98, %v376, 0.0
    %v378 = vadd.f32 %v374, %v377
    %v379 = vrot.slane %v378, 4
    %v380 = vadd.f32 %v378, %v379
    %v381 = vrot.slane %v380, 2
    %v382 = vadd.f32 %v380, %v381
    %v383 = vrot.slane %v382, 1
    %v384 = vadd.f32 %v382, %v383
    %v385 = vlog2.pop %v384
    %v386 = vmul.f32 %v385, 0.6931472
    %v387 = vsub.f32 %v371, %v386
    %v388 = vsub.f32 %v372, %v386
    %389 = vst [vmem:[#allocation2] sm:$0xff] %v387
    %390 = vst [vmem:[#allocation2 + $0x8] sm:$0x3] %v388
    // Predicated region
    $region30: #{tpu_custom_call.1} parent=1 // pred_check
      _
    $region31: #{tpu_custom_call.1} parent=1 // pred_check_branch
      %392 = sbr.rel (0) target = $region33
    $region32: #{tpu_custom_call.1} parent=1 // pred_region
      %s394 = ssub.s32 256, 256
      %395 = vsyncadd [#allocation3], %s394
      %s396 = sshll.u32 [#allocation2], 4
      %s397 = int_to_ptr.vmem [resolvable:$true] %s396
      %402 = dma.vmem_to_hbm [thread:$0]  %s397, 256, %s7, [#allocation3], 128, 128, 8
    $region33: #{tpu_custom_call.1} parent=1 // pred_fallthru
      _
    // Predicated region
    $region34: #{tpu_custom_call.1} parent=1 // pred_check
      _
    $region35: #{tpu_custom_call.1} parent=1 // pred_check_branch
      %404 = sbr.rel (0) target = $region37
    $region36: #{tpu_custom_call.1} parent=1 // pred_region
      %405 = dma.done [#allocation3], 256
    $region37: #{tpu_custom_call.1} parent=1 // pred_fallthru
      _
    %406 = vsyncpa [#allocation3], 1

</llo_original>
